<compile_context>
chip_gen: v5e
topology: v5e:2x2
jax: 0.10.0
libtpu: 0.0.40
codegen_flags: <defaults>
</compile_context>

<pallas_src>
import math

import jax
import jax.numpy as jnp
from jax.experimental import pallas as pl
from jax.experimental.pallas import tpu as pltpu


def make_positional_encoding_table(d_model: int, max_len: int = 5000) -> jnp.ndarray:
    """Deterministic buffer, identical to the PyTorch __init__ computation."""
    # Same latent requirement as the PyTorch original (odd d_model would break
    # the pe[:, 1::2] assignment there too).
    assert d_model % 2 == 0, "d_model must be even"
    position = jnp.arange(0, max_len, dtype=jnp.float32)[:, None]            # (max_len, 1)
    div_term = jnp.exp(
        jnp.arange(0, d_model, 2, dtype=jnp.float32) * (-math.log(10000.0) / d_model)
    )                                                                         # (d_model//2,)
    angles = position * div_term                                              # (max_len, d_model//2)
    pe = jnp.zeros((max_len, d_model), dtype=jnp.float32)
    pe = pe.at[:, 0::2].set(jnp.sin(angles))
    pe = pe.at[:, 1::2].set(jnp.cos(angles))
    return pe                                                                 # (max_len, d_model)


def _add_pe_kernel(x_ref, pe_ref, o_ref):
    # All refs are 2-D (rows, lanes): single vld/vld/vadd/vst stream.
    o_ref[...] = x_ref[...] + pe_ref[...]


def _cdiv(a: int, b: int) -> int:
    return -(-a // b)


def _sublane_multiple(itemsize: int) -> int:
    """Safe second-minor block multiple: 8 for f32, 16 for bf16, 32 for int8."""
    return 8 * max(1, 4 // itemsize)


def _pick_lane_width(flat: int) -> int | None:
    """Largest lane-dense width (multiple of 128) that divides S*D."""
    for lw in (512, 256, 128):
        if flat % lw == 0:
            return lw
    return None


def _pick_row_block(n_rows: int, lane_width: int, itemsize: int,
                    target_bytes: int) -> int:
    """Row-block size: multiple of the sublane tile, capped by the byte budget.
    If the whole dim already fits the budget, use the full dim (always legal)."""
    m = _sublane_multiple(itemsize)
    rows_budget = max(m, (target_bytes // (itemsize * lane_width)) // m * m)
    if n_rows <= rows_budget:
        return n_rows                   # full dim: single row-block, always legal
    return rows_budget                  # multiple of m; ragged last block via cdiv grid


def _ensure_min_blocks(ts: int, n_rows: int, batch: int, itemsize: int,
                       min_blocks: int = 4) -> int:
    """v7x has 2 TensorCores sharing the chip: make sure small-shape grids have
    enough parallel steps to shard (negligible cost on 1-TC v5e/v6e)."""
    m = _sublane_multiple(itemsize)
    while ts > m and _cdiv(n_rows, ts) * batch < min_blocks:
        smaller = max(m, (ts // 2) // m * m)
        if smaller >= ts:
            break
        ts = smaller
    return ts


def positional_encoding_forward(x: jnp.ndarray, pe: jnp.ndarray,
                                target_block_bytes: int = 4 << 20) -> jnp.ndarray:
    """x: (B, S, D); pe: (max_len, D). Returns x + pe[:S] (broadcast over batch)."""
    B, S, D = x.shape
    itemsize = x.dtype.itemsize
    # Cast the table to x.dtype up front: avoids a mixed-dtype store in-kernel
    # and halves pe HBM traffic when the surrounding model runs bf16.
    pe_slice = pe[:S, :].astype(x.dtype)
    flat = S * D

    if D % 128 == 0:
        # Last dim already lane-dense: tile (B, S, D) directly, no reshape.
        x2, pe2, n_rows, lw, need_reshape = x, pe_slice, S, D, False
    else:
        lw = _pick_lane_width(flat)
        if lw is not None:
            # Lane-dense repack: (B, S, D) -> (B, n_rows, lw). Row-major
            # contiguous reshape -> lowers to a bitcast, not a copy.
            n_rows = flat // lw
            x2 = x.reshape(B, n_rows, lw)
            pe2 = pe_slice.reshape(n_rows, lw)
            need_reshape = True
        else:
            # Fallback (S*D not a multiple of 128): block last dim = full D
            # (legal for any D); rows are still tiled so VMEM stays bounded.
            # D < 128 uses masked stores, but the pipeline/VMEM behaviour is fine.
            x2, pe2, n_rows, lw, need_reshape = x, pe_slice, S, D, False

    ts = _pick_row_block(n_rows, lw, itemsize, target_block_bytes)
    ts = _ensure_min_blocks(ts, n_rows, B, itemsize)
    n_row_blocks = _cdiv(n_rows, ts)

    # x, pe and out tiles are each double-buffered by the pipeline (6 tiles).
    tile_bytes = ts * lw * itemsize
    vmem_needed = 6 * tile_bytes
    # Only override the scoped-VMEM limit when the default (16 MiB on v5e)
    # might not be enough; 25% headroom, well under v7x's 64 MiB physical.
    vmem_limit = int(vmem_needed * 5 // 4) if vmem_needed > (12 << 20) else None

    cost = pl.CostEstimate(
        flops=B * S * D,                                    # one add per element
        transcendentals=0,
        bytes_accessed=(2 * B + 1) * S * D * itemsize,      # x read + out write + pe read
    )

    out = pl.pallas_call(
        _add_pe_kernel,
        out_shape=jax.ShapeDtypeStruct((B, n_rows, lw), x.dtype),
        grid_spec=pltpu.PrefetchScalarGridSpec(
            num_scalar_prefetch=0,
            # rows OUTER, batch INNER: the pe block index (s, 0) is constant
            # across the inner batch loop, so the pe tile is DMA'd once per
            # row block and stays resident in VMEM for all B batch steps.
            grid=(n_row_blocks, B),
            in_specs=[
                pl.BlockSpec((pl.Squeezed(), ts, lw), lambda s, b: (b, s, 0)),
                pl.BlockSpec((ts, lw), lambda s, b: (s, 0)),
            ],
            out_specs=pl.BlockSpec((pl.Squeezed(), ts, lw), lambda s, b: (b, s, 0)),
        ),
        compiler_params=pltpu.CompilerParams(
            dimension_semantics=("parallel", "parallel"),
            vmem_limit_bytes=vmem_limit,
        ),
        cost_estimate=cost,
    )(x2, pe2)

    return out.reshape(B, S, D) if need_reshape else out


if __name__ == "__main__":
    key = jax.random.PRNGKey(0)
    keys = jax.random.split(key, 4)

    # --- Test 1: module-sized small shape (D=32 lane-packed to width 256). ---
    B, S, D = 2, 8, 32
    pe = make_positional_encoding_table(D, max_len=64)
    x = jax.random.normal(keys[0], (B, S, D), dtype=jnp.float32)
    out = jax.block_until_ready(positional_encoding_forward(x, pe))
    ref = x + pe[None, :S, :]
    assert out.shape == (B, S, D)
    assert jnp.allclose(out, ref, atol=1e-6), "mismatch vs reference (test 1)"

    # --- Test 2: D % 128 == 0 (no reshape) + ragged row blocks (40 rows, ts=16). ---
    B2, S2, D2 = 2, 40, 128
    pe2 = make_positional_encoding_table(D2, max_len=64)
    x2 = jax.random.normal(keys[1], (B2, S2, D2), dtype=jnp.float32)
    out2 = jax.block_until_ready(
        positional_encoding_forward(x2, pe2, target_block_bytes=16 * 128 * 4))
    ref2 = x2 + pe2[None, :S2, :]
    assert jnp.allclose(out2, ref2, atol=1e-6), "mismatch vs reference (test 2)"

    # --- Test 3: fallback path (S*D not a multiple of 128, D=20). ---
    B3, S3, D3 = 2, 8, 20
    pe3 = make_positional_encoding_table(D3, max_len=32)
    x3 = jax.random.normal(keys[2], (B3, S3, D3), dtype=jnp.float32)
    out3 = jax.block_until_ready(positional_encoding_forward(x3, pe3))
    ref3 = x3 + pe3[None, :S3, :]
    assert jnp.allclose(out3, ref3, atol=1e-6), "mismatch vs reference (test 3)"

    # --- Test 4: bf16 I/O (pe cast to x.dtype in the wrapper; half the HBM traffic). ---
    B4, S4, D4 = 2, 8, 32
    pe4 = make_positional_encoding_table(D4, max_len=64)
    x4 = jax.random.normal(keys[3], (B4, S4, D4), dtype=jnp.float32).astype(jnp.bfloat16)
    out4 = jax.block_until_ready(positional_encoding_forward(x4, pe4))
    ref4 = x4 + pe4[None, :S4, :].astype(jnp.bfloat16)
    assert out4.dtype == jnp.bfloat16
    assert jnp.allclose(out4.astype(jnp.float32), ref4.astype(jnp.float32),
                        atol=1e-2), "mismatch vs reference (test 4)"

    print("KERNEL_OK")
</pallas_src>

<mosaic_0001>
module attributes {stable_mosaic.version = 11 : i64} {
  func.func @_add_pe_kernel(%arg0: i32, %arg1: i32, %arg2: memref<1x1x256xf32, #tpu.memory_space<vmem>>, %arg3: memref<1x256xf32, #tpu.memory_space<vmem>>, %arg4: memref<1x1x256xf32, #tpu.memory_space<vmem>>) attributes {dimension_semantics = [#tpu.dimension_semantics<parallel>, #tpu.dimension_semantics<parallel>], iteration_bounds = array<i64: 1, 2>, scalar_prefetch = 0 : i64, scratch_operands = 0 : i64, tpu.core_type = #tpu.core_type<tc>, window_params = [{transform_indices = @transform_0, window_bounds = array<i64: 1, 1, 256>}, {transform_indices = @transform_1, window_bounds = array<i64: 1, 256>}, {transform_indices = @transform_2, window_bounds = array<i64: 1, 1, 256>}]} {
    %c0 = arith.constant 0 : index
    %c0_0 = arith.constant 0 : index
    %c0_1 = arith.constant 0 : index
    %0 = vector.load %arg2[%c0, %c0_0, %c0_1] : memref<1x1x256xf32, #tpu.memory_space<vmem>>, vector<1x1x256xf32>
    %1 = vector.shape_cast %0 : vector<1x1x256xf32> to vector<1x256xf32>
    %c0_2 = arith.constant 0 : index
    %c0_3 = arith.constant 0 : index
    %2 = vector.load %arg3[%c0_2, %c0_3] : memref<1x256xf32, #tpu.memory_space<vmem>>, vector<1x256xf32>
    %3 = arith.addf %1, %2 : vector<1x256xf32>
    %c0_4 = arith.constant 0 : index
    %c0_5 = arith.constant 0 : index
    %c0_6 = arith.constant 0 : index
    %4 = vector.load %arg4[%c0_4, %c0_5, %c0_6] : memref<1x1x256xf32, #tpu.memory_space<vmem>>, vector<1x1x256xf32>
    %5 = vector.shape_cast %4 : vector<1x1x256xf32> to vector<1x256xf32>
    %6 = vector.shape_cast %3 : vector<1x256xf32> to vector<1x1x256xf32>
    tpu.vector_store %arg4[%c0_4, %c0_5, %c0_6], %6 {strides = array<i32>} : memref<1x1x256xf32, #tpu.memory_space<vmem>>, vector<1x1x256xf32>,
    return
  }
  func.func @transform_0(%arg0: i32, %arg1: i32) -> (i32, i32, i32) {
    %c0_i32 = arith.constant 0 : i32
    %c0_i32_0 = arith.constant 0 : i32
    return %arg1, %arg0, %c0_i32 : i32, i32, i32
  }
  func.func @transform_1(%arg0: i32, %arg1: i32) -> (i32, i32) {
    %c0_i32 = arith.constant 0 : i32
    %c0_i32_0 = arith.constant 0 : i32
    return %arg0, %c0_i32 : i32, i32
  }
  func.func @transform_2(%arg0: i32, %arg1: i32) -> (i32, i32, i32) {
    %c0_i32 = arith.constant 0 : i32
    %c0_i32_0 = arith.constant 0 : i32
    return %arg1, %arg0, %c0_i32 : i32, i32, i32
  }
}

</mosaic_0001>

<llo_original>
// kernel: tpu_custom_call.1
$region0: #{tpu_custom_call.1}
  #allocation0 [shape = 'u32[]', space=smem, size = 0x4, offset = 0x4, fixed_abs, tag = 'smem constant byte address 0x4 - core index']
  #allocation1 [shape = 'u32[72,128]{1,0:T(1,128)}', space=vmem, size = 0x9000, scoped, tag = 'internal scratch']
  %s0 = inlined_call_operand.hbm [shape: f32[2,1,256], index: 0, kind: input, shape index: {}]
  %s1 = inlined_call_operand.hbm [shape: f32[1,256], index: 1, kind: input, shape index: {}]
  %s2 = inlined_call_operand.hbm [shape: f32[2,1,256], index: 2, kind: output, shape index: {}]
  %s3 = sld [smem:[#allocation0]]
  $region49: #{tpu_custom_call.1} parent=0
    _
  %s5 = ssub.s32 1, %s3
  %s6 = scalar_select 0, %s5, %s3
  $region1: #{tpu_custom_call.1} parent=0
    #allocation2 [shape = 'u8[2048]{0}', space=vmem, size = 0x800, scoped, tag = 'input window, operand 0']
    #allocation3 [shape = 's32[2]{0}', space=sflag, size = 0x8, scoped, tag = 'scoped memory for tpu_custom_call.1']
    #allocation4 [shape = 's32[2]{0}', space=sflag, size = 0x8, scoped, tag = 'scoped memory for tpu_custom_call.1']
    #allocation5 [shape = 'u8[1024]{0}', space=vmem, size = 0x400, scoped, tag = 'input window, operand 1, single buffered']
    #allocation6 [shape = 's32[1]{0}', space=sflag, size = 0x4, scoped, tag = 'scoped memory for tpu_custom_call.1']
    #allocation7 [shape = 'u8[2048]{0}', space=vmem, size = 0x800, scoped, tag = 'output window, operand 0']
    %7 = vsyncpa [#allocation3], 0
    %s8 = scalar_lea.sflag [#allocation3], 1
    %9 = vsyncpa %s8, 0
    %10 = vsyncpa [#allocation6], 0
    %11 = vsyncpa [#allocation4], 0
    %s12 = scalar_lea.sflag [#allocation4], 1
    %13 = vsyncpa %s12, 0
    loop: start=0, step=1, limit=4
    $region2: #{tpu_custom_call.1} parent=1 // loop_pre_header
      _
    $region3: #{tpu_custom_call.1} parent=1 // loop_header
      %s15 = sphi 0, %s19
      %p16 = scmp.ge.s32.totalorder %s15, 4
      %s22 = sphi 0, %s34
      %s23 = sphi 0, %s30
      %s24 = sphi 0, %s22
      %s25 = sphi 0, %s23
      %s26 = sphi 0, %s24
      %s27 = sphi 0, %s25
      %s39 = sphi 0, %s41
      %s42 = sphi 0, %s39
      %s43 = sphi 0, %s42
      %s59 = sphi 0, %s43
      %s65 = sphi 0, %s67
      %s68 = sphi 0, %s65
      %s69 = sphi 0, %s68
      %s85 = sphi 0, %s69
      %s93 = sphi 0, %s95
      %s96 = sphi 0, %s93
      %s97 = sphi 0, %s96
      %s113 = sphi 0, %s97
    $region4: #{tpu_custom_call.1} parent=1 // loop_header_branch
      %18 = sbr.rel (%p16) target = $region8
    $region5: #{tpu_custom_call.1} parent=1 // loop_body
      %s20 = ssub.s32 %s15, 1
      %s21 = ssub.s32 %s15, 2
      %s28 = sadd.s32 1, %s23
      %p29 = scmp.ge.s32.totalorder %s28, 2
      %s30 = scalar_select %p29, 0, %s28
      %s31 = sadd.s32 1, %s22
      %s32 = scalar_select %p29, %s31, %s22
      %p33 = scmp.ge.s32.totalorder %s32, 1
      %s34 = scalar_select %p33, 0, %s32
      %s35 = ssub.s32 %s23, %s30
      %s36 = ssub.s32 %s22, %s34
      %s37 = sor.u32 %s35, %s36
      %p38 = scmp.eq.s32.totalorder %s37, 0
      %s40 = sadd.s32 %s39, 1
      %s41 = scalar_select %p38, %s39, %s40
      %p44 = pneg %p38
      %p45 = scmp.eq.s32.totalorder %s15, 1
      %p46 = por %p44, %p45
      %p47 = scmp.ne.s32.totalorder %s39, %s42
      %p48 = scmp.eq.s32.totalorder %s15, 0
      %p49 = por %p47, %p48
      %p50 = scmp.ne.s32.totalorder %s39, %s42
      %p51 = scmp.eq.s32.totalorder %s20, 1
      %p52 = por %p50, %p51
      %p53 = scmp.ne.s32.totalorder %s42, %s43
      %p54 = scmp.eq.s32.totalorder %s20, 0
      %p55 = por %p53, %p54
      %p56 = scmp.ne.s32.totalorder %s42, %s43
      %p57 = scmp.eq.s32.totalorder %s21, 1
      %p58 = por %p56, %p57
      %p60 = scmp.ne.s32.totalorder %s43, %s59
      %p61 = scmp.eq.s32.totalorder %s21, 0
      %p62 = por %p60, %p61
      %s63 = ssub.s32 %s22, %s34
      %p64 = scmp.eq.s32.totalorder %s63, 0
      %s66 = sadd.s32 %s65, 1
      %s67 = scalar_select %p64, %s65, %s66
      %p70 = pneg %p64
      %p71 = scmp.eq.s32.totalorder %s15, 1
      %p72 = por %p70, %p71
      %p73 = scmp.ne.s32.totalorder %s65, %s68
      %p74 = scmp.eq.s32.totalorder %s15, 0
      %p75 = por %p73, %p74
      %p76 = scmp.ne.s32.totalorder %s65, %s68
      %p77 = scmp.eq.s32.totalorder %s20, 1
      %p78 = por %p76, %p77
      %p79 = scmp.ne.s32.totalorder %s68, %s69
      %p80 = scmp.eq.s32.totalorder %s20, 0
      %p81 = por %p79, %p80
      %p82 = scmp.ne.s32.totalorder %s68, %s69
      %p83 = scmp.eq.s32.totalorder %s21, 1
      %p84 = por %p82, %p83
      %p86 = scmp.ne.s32.totalorder %s69, %s85
      %p87 = scmp.eq.s32.totalorder %s21, 0
      %p88 = por %p86, %p87
      %s89 = ssub.s32 %s23, %s30
      %s90 = ssub.s32 %s22, %s34
      %s91 = sor.u32 %s89, %s90
      %p92 = scmp.eq.s32.totalorder %s91, 0
      %s94 = sadd.s32 %s93, 1
      %s95 = scalar_select %p92, %s93, %s94
      %p98 = pneg %p92
      %p99 = scmp.eq.s32.totalorder %s15, 1
      %p100 = por %p98, %p99
      %p101 = scmp.ne.s32.totalorder %s93, %s96
      %p102 = scmp.eq.s32.totalorder %s15, 0
      %p103 = por %p101, %p102
      %p104 = scmp.ne.s32.totalorder %s93, %s96
      %p105 = scmp.eq.s32.totalorder %s20, 1
      %p106 = por %p104, %p105
      %p107 = scmp.ne.s32.totalorder %s96, %s97
      %p108 = scmp.eq.s32.totalorder %s20, 0
      %p109 = por %p107, %p108
      %p110 = scmp.ne.s32.totalorder %s96, %s97
      %p111 = scmp.eq.s32.totalorder %s21, 1
      %p112 = por %p110, %p111
      %p114 = scmp.ne.s32.totalorder %s97, %s113
      %p115 = scmp.eq.s32.totalorder %s21, 0
      %p116 = por %p114, %p115
      %p117 = scmp.le.s32.totalorder 1, %s15
      %p118 = scmp.lt.s32.totalorder %s15, 3
      %p119 = pnand %p117, %p118
      %p120 = pneg %p119
      // Predicated region
      $region9: #{tpu_custom_call.1} parent=5 // pred_check
        _
      $region10: #{tpu_custom_call.1} parent=5 // pred_check_branch
        %122 = sbr.rel (%p119) target = $region12
      $region11: #{tpu_custom_call.1} parent=5 // pred_region
        %s123 = ssub.s32 %s15, 1
        // Predicated region
        $region13: #{tpu_custom_call.1} parent=11 // pred_check
          %p124 = pneg %p81
        $region14: #{tpu_custom_call.1} parent=11 // pred_check_branch
          %126 = sbr.rel (%p124) target = $region16
        $region15: #{tpu_custom_call.1} parent=11 // pred_region
          %128 = vsyncadd [#allocation6], 0
          %s129 = smul.addr %s24, 2
          %s130 = scalar_lea.hbm %s1, %s129
          %s132 = sshll.u32 %s130, 4
          %s133 = int_to_ptr.hbm [resolvable:$true] %s132
          %s134 = sshll.u32 [#allocation5], 4
          %s135 = int_to_ptr.vmem [resolvable:$true] %s134
          %137 = dma.hbm_to_vmem [thread:$0]  %s133, 32, %s135, [#allocation6]
        $region16: #{tpu_custom_call.1} parent=11 // pred_fallthru
          _
      $region12: #{tpu_custom_call.1} parent=5 // pred_fallthru
        _
      %p138 = scmp.lt.s32.totalorder %s15, 2
      // Predicated region
      $region17: #{tpu_custom_call.1} parent=5 // pred_check
        %p139 = pneg %p138
      $region18: #{tpu_custom_call.1} parent=5 // pred_check_branch
        %141 = sbr.rel (%p139) target = $region20
      $region19: #{tpu_custom_call.1} parent=5 // pred_region
        // Predicated region
        $region21: #{tpu_custom_call.1} parent=19 // pred_check
          %p142 = pneg %p49
        $region22: #{tpu_custom_call.1} parent=19 // pred_check_branch
          %144 = sbr.rel (%p142) target = $region24
        $region23: #{tpu_custom_call.1} parent=19 // pred_region
          %s145 = sand.u32 %s39, 1
          %s146 = scalar_lea.sflag [#allocation3], %s145
          %s147 = sand.u32 %s39, 1
          %s148 = smul.addr %s147, 2
          %s149 = scalar_lea.vmem [#allocation2], %s148
          %151 = vsyncadd %s146, 0
          %s152 = smul.addr %s22, 2
          %s153 = smul.addr %s23, 2
          %s154 = sadd.s32 %s152, %s153
          %s155 = scalar_lea.hbm %s0, %s154
          %s157 = sshll.u32 %s155, 4
          %s158 = int_to_ptr.hbm [resolvable:$true] %s157
          %s159 = sshll.u32 %s149, 4
          %s160 = int_to_ptr.vmem [resolvable:$true] %s159
          %162 = dma.hbm_to_vmem [thread:$0]  %s158, 32, %s160, %s146
        $region24: #{tpu_custom_call.1} parent=19 // pred_fallthru
          _
      $region20: #{tpu_custom_call.1} parent=5 // pred_fallthru
        _
      %p163 = scmp.le.s32.totalorder 1, %s15
      %p164 = scmp.lt.s32.totalorder %s15, 3
      %p165 = pnand %p163, %p164
      %p166 = pneg %p165
      // Predicated region
      $region25: #{tpu_custom_call.1} parent=5 // pred_check
        _
      $region26: #{tpu_custom_call.1} parent=5 // pred_check_branch
        %168 = sbr.rel (%p165) target = $region28
      $region27: #{tpu_custom_call.1} parent=5 // pred_region
        %s169 = ssub.s32 %s15, 1
        %s170 = sand.u32 %s42, 1
        %s171 = scalar_lea.sflag [#allocation3], %s170
        %s172 = sand.u32 %s42, 1
        %s173 = smul.addr %s172, 2
        %s174 = scalar_lea.vmem [#allocation2], %s173
        // Predicated region
        $region29: #{tpu_custom_call.1} parent=27 // pred_check
          %p175 = pneg %p55
        $region30: #{tpu_custom_call.1} parent=27 // pred_check_branch
          %177 = sbr.rel (%p175) target = $region32
        $region31: #{tpu_custom_call.1} parent=27 // pred_region
          %179 = dma.done %s171, 32
        $region32: #{tpu_custom_call.1} parent=27 // pred_fallthru
          _
        // Predicated region
        $region33: #{tpu_custom_call.1} parent=27 // pred_check
          %p180 = pneg %p81
        $region34: #{tpu_custom_call.1} parent=27 // pred_check_branch
          %182 = sbr.rel (%p180) target = $region36
        $region35: #{tpu_custom_call.1} parent=27 // pred_region
          %184 = dma.done [#allocation6], 32
        $region36: #{tpu_custom_call.1} parent=27 // pred_fallthru
          _
        %s185 = sand.u32 %s42, 1
        %s186 = scalar_lea.sflag [#allocation3], %s185
        %s187 = sand.u32 %s42, 1
        %s188 = smul.addr %s187, 2
        %s189 = scalar_lea.vmem [#allocation2], %s188
        %p190 = pneg %p55
        %p191 = pneg %p52
        %p192 = pneg %p81
        %p193 = pneg %p78
        %p194 = pneg %p109
        %p195 = pneg %p106
        %s196 = sand.u32 %s96, 1
        %s197 = scalar_lea.sflag [#allocation4], %s196
        %s198 = sand.u32 %s96, 1
        %s199 = smul.addr %s198, 2
        %s200 = scalar_lea.vmem [#allocation7], %s199
        %v201 = vld [vmem:[%s174] sm:$0x3]
        %v202 = vld [vmem:[#allocation5] sm:$0x3]
        %v203 = vadd.f32 %v201, %v202
        %v204 = vlaneseq
        %vm205 = vcmp.ge.s32.totalorder %v204, 0
        %vm206 = vcmp.lt.s32.totalorder %v204, 256
        %vm207 = vmand %vm205, %vm206
        %208 = vst.msk [vmem:[%s200] sm:$0x3] %vm207, %v203
        %s209 = sand.u32 %s96, 1
        %s210 = scalar_lea.sflag [#allocation4], %s209
        %s211 = sand.u32 %s96, 1
        %s212 = smul.addr %s211, 2
        %s213 = scalar_lea.vmem [#allocation7], %s212
        // Predicated region
        $region37: #{tpu_custom_call.1} parent=27 // pred_check
          %p214 = pneg %p106
        $region38: #{tpu_custom_call.1} parent=27 // pred_check_branch
          %216 = sbr.rel (%p214) target = $region40
        $region39: #{tpu_custom_call.1} parent=27 // pred_region
          %218 = vsyncadd %s210, 0
          %s219 = smul.addr %s24, 2
          %s220 = smul.addr %s25, 2
          %s221 = sadd.s32 %s219, %s220
          %s222 = scalar_lea.hbm %s2, %s221
          %s224 = sshll.u32 %s213, 4
          %s225 = int_to_ptr.vmem [resolvable:$true] %s224
          %s226 = sshll.u32 %s222, 4
          %s227 = int_to_ptr.hbm [resolvable:$true] %s226
          %229 = dma.vmem_to_hbm [thread:$0]  %s225, 32, %s227, %s210
        $region40: #{tpu_custom_call.1} parent=27 // pred_fallthru
          _
      $region28: #{tpu_custom_call.1} parent=5 // pred_fallthru
        _
      %p230 = scmp.le.s32.totalorder 2, %s15
      // Predicated region
      $region41: #{tpu_custom_call.1} parent=5 // pred_check
        %p231 = pneg %p230
      $region42: #{tpu_custom_call.1} parent=5 // pred_check_branch
        %233 = sbr.rel (%p231) target = $region44
      $region43: #{tpu_custom_call.1} parent=5 // pred_region
        %s234 = ssub.s32 %s15, 2
        // Predicated region
        $region45: #{tpu_custom_call.1} parent=43 // pred_check
          %p235 = pneg %p112
        $region46: #{tpu_custom_call.1} parent=43 // pred_check_branch
          %237 = sbr.rel (%p235) target = $region48
        $region47: #{tpu_custom_call.1} parent=43 // pred_region
          %s238 = sand.u32 %s97, 1
          %s239 = scalar_lea.sflag [#allocation4], %s238
          %s240 = sand.u32 %s97, 1
          %s241 = smul.addr %s240, 2
          %s242 = scalar_lea.vmem [#allocation7], %s241
          %244 = dma.done %s239, 32
        $region48: #{tpu_custom_call.1} parent=43 // pred_fallthru
          _
      $region44: #{tpu_custom_call.1} parent=5 // pred_fallthru
        _
    $region6: #{tpu_custom_call.1} parent=1 // loop_footer
      %s19 = sadd.s32 1, %s15
    $region7: #{tpu_custom_call.1} parent=1 // loop_footer_branch
      %14 = sbr.rel target = $region3
    $region8: #{tpu_custom_call.1} parent=1 // loop_exit
      _
    %245 = vsyncpa [#allocation3], 1
    %s246 = scalar_lea.sflag [#allocation3], 1
    %247 = vsyncpa %s246, 1
    %248 = vsyncpa [#allocation6], 1
    %249 = vsyncpa [#allocation4], 1
    %s250 = scalar_lea.sflag [#allocation4], 1
    %251 = vsyncpa %s250, 1

</llo_original>
